<compile_context>
chip_gen: v5e
topology: v5e:2x2
jax: 0.10.0
libtpu: 0.0.40
codegen_flags: <defaults>
</compile_context>

<pallas_src>
import functools

import jax
import jax.numpy as jnp
from jax.experimental import pallas as pl
from jax.experimental.pallas import tpu as pltpu

ALPHA = 0.35    # focal alpha (DiceFocalBCELoss default)
GAMMA = 3       # focal gamma (DiceFocalBCELoss default, integer power)
SMOOTH = 1e-6   # dice smooth

_NUM_STATS = 5  # intersection, sum(sigmoid), sum(targets), sum(bce), sum(focal)
_ACC_ROWS = 8 * _NUM_STATS  # 40 rows of 128 lanes (5 full-vreg accumulators)


def _dice_focal_bce_kernel(x_ref, t_ref, out_ref, acc_ref, *, tile_rows):
    """x_ref/t_ref: (TR, 128) tiles; out_ref/acc_ref: (40, 128) partial sums."""
    r = pl.program_id(1)

    @pl.when(r == 0)
    def _init():
        acc_ref[...] = jnp.zeros_like(acc_ref)

    x = x_ref[...].astype(jnp.float32)   # foreground logits
    t = t_ref[...].astype(jnp.float32)   # binary targets (cast from narrow dtype)

    # --- single transcendental chain shared by dice / bce / focal ----------
    z = jnp.exp(-jnp.abs(x))                       # EUP exp (only one)
    inv = 1.0 / (1.0 + z)                          # EUP reciprocal
    # sigmoid(x) = 1/(1+z) for x>=0, z/(1+z) = 1 - 1/(1+z) for x<0
    p = jnp.where(x >= 0.0, inv, 1.0 - inv)
    # numerically stable binary_cross_entropy_with_logits (reduction='none')
    bce = jnp.maximum(x, 0.0) - x * t + jnp.log1p(z)
    # pt = exp(-bce) == p^t * (1-p)^(1-t); exact VPU select for binary targets
    pt = jnp.where(t > 0.5, p, 1.0 - p)
    q = 1.0 - pt
    focal = ALPHA * (q * q * q) * bce              # gamma = 3 (integer power)

    # --- accumulate per-statistic (8,128) slabs (pure VALU, no XLU) --------
    def _acc(stat_idx, val):
        lo = 8 * stat_idx
        if tile_rows % 8 == 0:
            slab = jnp.sum(val.reshape(tile_rows // 8, 8, 128), axis=0)
            acc_ref[lo:lo + 8, :] += slab
        else:
            # small-shape fallback (tile == full extent, not a multiple of 8)
            acc_ref[lo:lo + 1, :] += jnp.sum(val, axis=0, keepdims=True)

    _acc(0, p * t)   # intersection
    _acc(1, p)       # sum(sigmoid)
    _acc(2, t)       # sum(targets)
    _acc(3, bce)     # sum(bce)
    _acc(4, focal)   # sum(focal)

    @pl.when(r == pl.num_programs(1) - 1)
    def _finalize():
        out_ref[...] = acc_ref[...]   # dump raw partial sums for this sample


def dice_focal_bce_loss(inputs, targets, *, max_tile_rows=2048):
    """inputs: (N, 2, H, W) logits; targets: (N, 1, H, W) binary masks (any dtype)."""
    N, C, H, W = inputs.shape
    assert C == 2, "module takes 2-channel logits (background, foreground)"
    assert targets.shape == (N, 1, H, W)
    hw = H * W
    # TODO(synk): pad + mask to support H*W not divisible by 128 without bias.
    assert hw % 128 == 0, "kernel requires H*W divisible by 128"
    rows_per_n = hw // 128

    # Largest multiple-of-8 divisor of rows_per_n, capped (~1 MiB f32 tile,
    # safe for v7x's 64 MiB VMEM with double-buffering); full extent fallback.
    if rows_per_n % 8 == 0:
        tr = 8
        cand = 8
        cap = min(rows_per_n, max_tile_rows)
        while cand <= cap:
            if rows_per_n % cand == 0:
                tr = cand
            cand += 8
    else:
        tr = rows_per_n

    grid = (N, rows_per_n // tr)

    # Free, contiguous reshapes — no extra HBM pass, no channel slice, no cast.
    x4 = inputs.reshape(N, 2, rows_per_n, 128)
    t4 = targets.reshape(N, 1, rows_per_n, 128)   # keep narrow dtype in HBM

    partials = pl.pallas_call(
        functools.partial(_dice_focal_bce_kernel, tile_rows=tr),
        out_shape=jax.ShapeDtypeStruct((N, _ACC_ROWS, 128), jnp.float32),
        grid_spec=pltpu.PrefetchScalarGridSpec(
            num_scalar_prefetch=0,
            grid=grid,
            in_specs=[
                # foreground channel selected by index_map (block idx 1, squeezed)
                pl.BlockSpec((None, None, tr, 128), lambda n, r: (n, 1, r, 0)),
                pl.BlockSpec((None, None, tr, 128), lambda n, r: (n, 0, r, 0)),
            ],
            out_specs=pl.BlockSpec((None, _ACC_ROWS, 128), lambda n, r: (n, 0, 0)),
            scratch_shapes=[pltpu.VMEM((_ACC_ROWS, 128), jnp.float32)],
        ),
        compiler_params=pltpu.CompilerParams(
            dimension_semantics=("parallel", "arbitrary"),
        ),
    )(x4, t4)

    # Tiny final combine in plain JAX: (N, 5, 8, 128) partials -> 5 scalars.
    sums = partials.reshape(N, _NUM_STATS, 8, 128).sum(axis=(0, 2, 3))
    inter, psum, tsum, bsum, fsum = (sums[i] for i in range(_NUM_STATS))
    n_elems = jnp.float32(N * hw)

    dice_loss = 1.0 - (2.0 * inter + SMOOTH) / (psum + tsum + SMOOTH)
    bce_mean = bsum / n_elems
    focal_mean = fsum / n_elems
    return 0.5 * dice_loss + 0.25 * bce_mean + 0.25 * focal_mean


def _reference_loss(inputs, targets):
    """Pure-JAX reference mirroring the PyTorch module exactly."""
    x = inputs[:, 1, :, :].astype(jnp.float32)
    t = targets[:, 0, :, :].astype(jnp.float32)
    p = jax.nn.sigmoid(x)
    inter = jnp.sum(p * t)
    dice = (2.0 * inter + SMOOTH) / (jnp.sum(p) + jnp.sum(t) + SMOOTH)
    bce = jnp.maximum(x, 0.0) - x * t + jnp.log1p(jnp.exp(-jnp.abs(x)))
    pt = jnp.exp(-bce)
    focal = ALPHA * (1.0 - pt) ** GAMMA * bce
    return 0.5 * (1.0 - dice) + 0.25 * jnp.mean(bce) + 0.25 * jnp.mean(focal)


if __name__ == "__main__":
    key = jax.random.PRNGKey(0)
    k_logits, k_mask = jax.random.split(key)

    N, H, W = 2, 64, 64
    inputs = jax.random.normal(k_logits, (N, 2, H, W), dtype=jnp.float32)
    # binary masks stay in a narrow dtype; the kernel casts to f32 internally
    targets = (jax.random.uniform(k_mask, (N, 1, H, W)) > 0.5).astype(jnp.int8)

    loss = dice_focal_bce_loss(inputs, targets)
    loss = jax.block_until_ready(loss)

    ref = _reference_loss(inputs, targets)
    assert jnp.allclose(loss, ref, rtol=1e-5, atol=1e-5), (loss, ref)

    print("KERNEL_OK")
</pallas_src>

<mosaic_0001>
module attributes {stable_mosaic.version = 11 : i64} {
  func.func @_dice_focal_bce_kernel(%arg0: i32, %arg1: i32, %arg2: memref<1x1x32x128xf32, #tpu.memory_space<vmem>>, %arg3: memref<1x1x32x128xi8, #tpu.memory_space<vmem>>, %arg4: memref<1x40x128xf32, #tpu.memory_space<vmem>>, %arg5: memref<40x128xf32, #tpu.memory_space<vmem>>) attributes {dimension_semantics = [#tpu.dimension_semantics<parallel>, #tpu.dimension_semantics<arbitrary>], iteration_bounds = array<i64: 2, 1>, scalar_prefetch = 0 : i64, scratch_operands = 1 : i64, tpu.core_type = #tpu.core_type<tc>, window_params = [{transform_indices = @transform_0, window_bounds = array<i64: 1, 1, 32, 128>}, {transform_indices = @transform_1, window_bounds = array<i64: 1, 1, 32, 128>}, {transform_indices = @transform_2, window_bounds = array<i64: 1, 40, 128>}]} {
    %c0_i32 = arith.constant 0 : i32
    %0 = arith.cmpi eq, %arg1, %c0_i32 : i32
    %1 = arith.extui %0 : i1 to i32
    %c0_i32_0 = arith.constant 0 : i32
    %2 = arith.cmpi ne, %1, %c0_i32_0 : i32
    scf.if %2 {
      %cst_40 = arith.constant 0.000000e+00 : f32
      %68 = vector.broadcast %cst_40 : f32 to vector<40x128xf32>
      %c0_41 = arith.constant 0 : index
      %c0_42 = arith.constant 0 : index
      %69 = vector.load %arg5[%c0_41, %c0_42] : memref<40x128xf32, #tpu.memory_space<vmem>>, vector<40x128xf32>
      tpu.vector_store %arg5[%c0_41, %c0_42], %68 {strides = array<i32>} : memref<40x128xf32, #tpu.memory_space<vmem>>, vector<40x128xf32>,
    } else {
    }
    %c0 = arith.constant 0 : index
    %c0_1 = arith.constant 0 : index
    %c0_2 = arith.constant 0 : index
    %c0_3 = arith.constant 0 : index
    %3 = vector.load %arg2[%c0, %c0_1, %c0_2, %c0_3] : memref<1x1x32x128xf32, #tpu.memory_space<vmem>>, vector<1x1x32x128xf32>
    %4 = vector.shape_cast %3 : vector<1x1x32x128xf32> to vector<32x128xf32>
    %c0_4 = arith.constant 0 : index
    %c0_5 = arith.constant 0 : index
    %c0_6 = arith.constant 0 : index
    %c0_7 = arith.constant 0 : index
    %5 = vector.load %arg3[%c0_4, %c0_5, %c0_6, %c0_7] : memref<1x1x32x128xi8, #tpu.memory_space<vmem>>, vector<1x1x32x128xi8>
    %6 = vector.shape_cast %5 : vector<1x1x32x128xi8> to vector<32x128xi8>
    %7 = arith.sitofp %6 : vector<32x128xi8> to vector<32x128xf32>
    %8 = math.absf %4 : vector<32x128xf32>
    %cst = arith.constant 0.000000e+00 : f32
    %9 = vector.broadcast %cst : f32 to vector<32x128xf32>
    %10 = arith.subf %9, %8 : vector<32x128xf32>
    %11 = math.exp %10 : vector<32x128xf32>
    %cst_8 = arith.constant 1.000000e+00 : f32
    %12 = vector.broadcast %cst_8 : f32 to vector<32x128xf32>
    %13 = arith.addf %12, %11 : vector<32x128xf32>
    %cst_9 = arith.constant 1.000000e+00 : f32
    %14 = vector.broadcast %cst_9 : f32 to vector<32x128xf32>
    %15 = arith.divf %14, %13 : vector<32x128xf32>
    %cst_10 = arith.constant 0.000000e+00 : f32
    %16 = vector.broadcast %cst_10 : f32 to vector<32x128xf32>
    %17 = arith.cmpf oge, %4, %16 : vector<32x128xf32>
    %cst_11 = arith.constant 1.000000e+00 : f32
    %18 = vector.broadcast %cst_11 : f32 to vector<32x128xf32>
    %19 = arith.subf %18, %15 : vector<32x128xf32>
    %20 = arith.select %17, %15, %19 : vector<32x128xi1>, vector<32x128xf32>
    %cst_12 = arith.constant 0.000000e+00 : f32
    %21 = vector.broadcast %cst_12 : f32 to vector<32x128xf32>
    %22 = arith.maximumf %4, %21 : vector<32x128xf32>
    %23 = arith.mulf %4, %7 : vector<32x128xf32>
    %24 = arith.subf %22, %23 : vector<32x128xf32>
    %25 = math.log1p %11 : vector<32x128xf32>
    %26 = arith.addf %24, %25 : vector<32x128xf32>
    %cst_13 = arith.constant 5.000000e-01 : f32
    %27 = vector.broadcast %cst_13 : f32 to vector<32x128xf32>
    %28 = arith.cmpf ogt, %7, %27 : vector<32x128xf32>
    %cst_14 = arith.constant 1.000000e+00 : f32
    %29 = vector.broadcast %cst_14 : f32 to vector<32x128xf32>
    %30 = arith.subf %29, %20 : vector<32x128xf32>
    %31 = arith.select %28, %20, %30 : vector<32x128xi1>, vector<32x128xf32>
    %cst_15 = arith.constant 1.000000e+00 : f32
    %32 = vector.broadcast %cst_15 : f32 to vector<32x128xf32>
    %33 = arith.subf %32, %31 : vector<32x128xf32>
    %34 = arith.mulf %33, %33 : vector<32x128xf32>
    %35 = arith.mulf %34, %33 : vector<32x128xf32>
    %cst_16 = arith.constant 3.500000e-01 : f32
    %36 = vector.broadcast %cst_16 : f32 to vector<32x128xf32>
    %37 = arith.mulf %36, %35 : vector<32x128xf32>
    %38 = arith.mulf %37, %26 : vector<32x128xf32>
    %39 = arith.mulf %20, %7 : vector<32x128xf32>
    %40 = vector.shape_cast %39 : vector<32x128xf32> to vector<4x8x128xf32>
    %cst_17 = arith.constant dense<0.000000e+00> : vector<8x128xf32>
    %41 = vector.multi_reduction <add>, %40, %cst_17 [0] : vector<4x8x128xf32> to vector<8x128xf32>
    %c0_18 = arith.constant 0 : index
    %c0_19 = arith.constant 0 : index
    %42 = vector.load %arg5[%c0_18, %c0_19] : memref<40x128xf32, #tpu.memory_space<vmem>>, vector<8x128xf32>
    %43 = arith.addf %42, %41 : vector<8x128xf32>
    %c0_20 = arith.constant 0 : index
    %c0_21 = arith.constant 0 : index
    %44 = vector.load %arg5[%c0_20, %c0_21] : memref<40x128xf32, #tpu.memory_space<vmem>>, vector<8x128xf32>
    tpu.vector_store %arg5[%c0_20, %c0_21], %43 {strides = array<i32>} : memref<40x128xf32, #tpu.memory_space<vmem>>, vector<8x128xf32>,
    %45 = vector.shape_cast %20 : vector<32x128xf32> to vector<4x8x128xf32>
    %cst_22 = arith.constant dense<0.000000e+00> : vector<8x128xf32>
    %46 = vector.multi_reduction <add>, %45, %cst_22 [0] : vector<4x8x128xf32> to vector<8x128xf32>
    %c8 = arith.constant 8 : index
    %c0_23 = arith.constant 0 : index
    %47 = vector.load %arg5[%c8, %c0_23] : memref<40x128xf32, #tpu.memory_space<vmem>>, vector<8x128xf32>
    %48 = arith.addf %47, %46 : vector<8x128xf32>
    %c8_24 = arith.constant 8 : index
    %c0_25 = arith.constant 0 : index
    %49 = vector.load %arg5[%c8_24, %c0_25] : memref<40x128xf32, #tpu.memory_space<vmem>>, vector<8x128xf32>
    tpu.vector_store %arg5[%c8_24, %c0_25], %48 {strides = array<i32>} : memref<40x128xf32, #tpu.memory_space<vmem>>, vector<8x128xf32>,
    %50 = vector.shape_cast %7 : vector<32x128xf32> to vector<4x8x128xf32>
    %cst_26 = arith.constant dense<0.000000e+00> : vector<8x128xf32>
    %51 = vector.multi_reduction <add>, %50, %cst_26 [0] : vector<4x8x128xf32> to vector<8x128xf32>
    %c16 = arith.constant 16 : index
    %c0_27 = arith.constant 0 : index
    %52 = vector.load %arg5[%c16, %c0_27] : memref<40x128xf32, #tpu.memory_space<vmem>>, vector<8x128xf32>
    %53 = arith.addf %52, %51 : vector<8x128xf32>
    %c16_28 = arith.constant 16 : index
    %c0_29 = arith.constant 0 : index
    %54 = vector.load %arg5[%c16_28, %c0_29] : memref<40x128xf32, #tpu.memory_space<vmem>>, vector<8x128xf32>
    tpu.vector_store %arg5[%c16_28, %c0_29], %53 {strides = array<i32>} : memref<40x128xf32, #tpu.memory_space<vmem>>, vector<8x128xf32>,
    %55 = vector.shape_cast %26 : vector<32x128xf32> to vector<4x8x128xf32>
    %cst_30 = arith.constant dense<0.000000e+00> : vector<8x128xf32>
    %56 = vector.multi_reduction <add>, %55, %cst_30 [0] : vector<4x8x128xf32> to vector<8x128xf32>
    %c24 = arith.constant 24 : index
    %c0_31 = arith.constant 0 : index
    %57 = vector.load %arg5[%c24, %c0_31] : memref<40x128xf32, #tpu.memory_space<vmem>>, vector<8x128xf32>
    %58 = arith.addf %57, %56 : vector<8x128xf32>
    %c24_32 = arith.constant 24 : index
    %c0_33 = arith.constant 0 : index
    %59 = vector.load %arg5[%c24_32, %c0_33] : memref<40x128xf32, #tpu.memory_space<vmem>>, vector<8x128xf32>
    tpu.vector_store %arg5[%c24_32, %c0_33], %58 {strides = array<i32>} : memref<40x128xf32, #tpu.memory_space<vmem>>, vector<8x128xf32>,
    %60 = vector.shape_cast %38 : vector<32x128xf32> to vector<4x8x128xf32>
    %cst_34 = arith.constant dense<0.000000e+00> : vector<8x128xf32>
    %61 = vector.multi_reduction <add>, %60, %cst_34 [0] : vector<4x8x128xf32> to vector<8x128xf32>
    %c32 = arith.constant 32 : index
    %c0_35 = arith.constant 0 : index
    %62 = vector.load %arg5[%c32, %c0_35] : memref<40x128xf32, #tpu.memory_space<vmem>>, vector<8x128xf32>
    %63 = arith.addf %62, %61 : vector<8x128xf32>
    %c32_36 = arith.constant 32 : index
    %c0_37 = arith.constant 0 : index
    %64 = vector.load %arg5[%c32_36, %c0_37] : memref<40x128xf32, #tpu.memory_space<vmem>>, vector<8x128xf32>
    tpu.vector_store %arg5[%c32_36, %c0_37], %63 {strides = array<i32>} : memref<40x128xf32, #tpu.memory_space<vmem>>, vector<8x128xf32>,
    %c0_i32_38 = arith.constant 0 : i32
    %65 = arith.cmpi eq, %arg1, %c0_i32_38 : i32
    %66 = arith.extui %65 : i1 to i32
    %c0_i32_39 = arith.constant 0 : i32
    %67 = arith.cmpi ne, %66, %c0_i32_39 : i32
    scf.if %67 {
      %c0_40 = arith.constant 0 : index
      %c0_41 = arith.constant 0 : index
      %68 = vector.load %arg5[%c0_40, %c0_41] : memref<40x128xf32, #tpu.memory_space<vmem>>, vector<40x128xf32>
      %c0_42 = arith.constant 0 : index
      %c0_43 = arith.constant 0 : index
      %c0_44 = arith.constant 0 : index
      %69 = vector.load %arg4[%c0_42, %c0_43, %c0_44] : memref<1x40x128xf32, #tpu.memory_space<vmem>>, vector<1x40x128xf32>
      %70 = vector.shape_cast %69 : vector<1x40x128xf32> to vector<40x128xf32>
      %71 = vector.shape_cast %68 : vector<40x128xf32> to vector<1x40x128xf32>
      tpu.vector_store %arg4[%c0_42, %c0_43, %c0_44], %71 {strides = array<i32>} : memref<1x40x128xf32, #tpu.memory_space<vmem>>, vector<1x40x128xf32>,
    } else {
    }
    return
  }
  func.func @transform_0(%arg0: i32, %arg1: i32) -> (i32, i32, i32, i32) {
    %c1_i32 = arith.constant 1 : i32
    %c0_i32 = arith.constant 0 : i32
    %c0_i32_0 = arith.constant 0 : i32
    return %arg0, %c1_i32, %arg1, %c0_i32 : i32, i32, i32, i32
  }
  func.func @transform_1(%arg0: i32, %arg1: i32) -> (i32, i32, i32, i32) {
    %c0_i32 = arith.constant 0 : i32
    %c0_i32_0 = arith.constant 0 : i32
    %c0_i32_1 = arith.constant 0 : i32
    return %arg0, %c0_i32, %arg1, %c0_i32_0 : i32, i32, i32, i32
  }
  func.func @transform_2(%arg0: i32, %arg1: i32) -> (i32, i32, i32) {
    %c0_i32 = arith.constant 0 : i32
    %c0_i32_0 = arith.constant 0 : i32
    %c0_i32_1 = arith.constant 0 : i32
    return %arg0, %c0_i32, %c0_i32_0 : i32, i32, i32
  }
}

</mosaic_0001>

<llo_original>
// kernel: tpu_custom_call.1
$region0: #{tpu_custom_call.1}
  #allocation0 [shape = 'u32[]', space=smem, size = 0x4, offset = 0x4, fixed_abs, tag = 'smem constant byte address 0x4 - core index']
  #allocation1 [shape = 'u32[72,128]{1,0:T(1,128)}', space=vmem, size = 0x9000, scoped, tag = 'internal scratch']
  #allocation2 [shape = 'f32[40,128]{1,0:T(8,128)}', space=vmem, size = 0x5000, scoped, tag = 'scratch operand']
  %s0 = inlined_call_operand.hbm [shape: f32[2,2,32,128], index: 0, kind: input, shape index: {}]
  %s1 = inlined_call_operand.hbm [shape: s8[2,1,32,128], index: 1, kind: input, shape index: {}]
  %s2 = inlined_call_operand.hbm [shape: f32[2,40,128], index: 2, kind: output, shape index: {}]
  %s3 = sld [smem:[#allocation0]]
  $region57: #{tpu_custom_call.1} parent=0
    _
  %s5 = ssub.s32 1, %s3
  %s6 = scalar_select 0, %s5, %s3
  $region1: #{tpu_custom_call.1} parent=0
    #allocation3 [shape = 'u8[32768]{0}', space=vmem, size = 0x8000, scoped, tag = 'input window, operand 0']
    #allocation4 [shape = 's32[2]{0}', space=sflag, size = 0x8, scoped, tag = 'scoped memory for tpu_custom_call.1']
    #allocation5 [shape = 's32[2]{0}', space=sflag, size = 0x8, scoped, tag = 'scoped memory for tpu_custom_call.1']
    #allocation6 [shape = 'u8[8192]{0}', space=vmem, size = 0x2000, scoped, tag = 'input window, operand 1']
    #allocation7 [shape = 's32[2]{0}', space=sflag, size = 0x8, scoped, tag = 'scoped memory for tpu_custom_call.1']
    #allocation8 [shape = 'u8[40960]{0}', space=vmem, size = 0xa000, scoped, tag = 'output window, operand 0']
    %7 = vsyncpa [#allocation4], 0
    %s8 = scalar_lea.sflag [#allocation4], 1
    %9 = vsyncpa %s8, 0
    %10 = vsyncpa [#allocation7], 0
    %s11 = scalar_lea.sflag [#allocation7], 1
    %12 = vsyncpa %s11, 0
    %13 = vsyncpa [#allocation5], 0
    %s14 = scalar_lea.sflag [#allocation5], 1
    %15 = vsyncpa %s14, 0
    loop: start=0, step=1, limit=4
    $region2: #{tpu_custom_call.1} parent=1 // loop_pre_header
      _
    $region3: #{tpu_custom_call.1} parent=1 // loop_header
      %s17 = sphi 0, %s21
      %p18 = scmp.ge.s32.totalorder %s17, 4
      %s24 = sphi 0, %s36
      %s25 = sphi 0, %s32
      %s26 = sphi 0, %s24
      %s27 = sphi 0, %s25
      %s28 = sphi 0, %s26
      %s29 = sphi 0, %s27
      %s41 = sphi 0, %s43
      %s44 = sphi 0, %s41
      %s45 = sphi 0, %s44
      %s61 = sphi 0, %s45
      %s69 = sphi 0, %s71
      %s72 = sphi 0, %s69
      %s73 = sphi 0, %s72
      %s89 = sphi 0, %s73
      %s95 = sphi 0, %s97
      %s98 = sphi 0, %s95
      %s99 = sphi 0, %s98
      %s115 = sphi 0, %s99
    $region4: #{tpu_custom_call.1} parent=1 // loop_header_branch
      %20 = sbr.rel (%p18) target = $region8
    $region5: #{tpu_custom_call.1} parent=1 // loop_body
      %s22 = ssub.s32 %s17, 1
      %s23 = ssub.s32 %s17, 2
      %s30 = sadd.s32 1, %s25
      %p31 = scmp.ge.s32.totalorder %s30, 1
      %s32 = scalar_select %p31, 0, %s30
      %s33 = sadd.s32 1, %s24
      %s34 = scalar_select %p31, %s33, %s24
      %p35 = scmp.ge.s32.totalorder %s34, 2
      %s36 = scalar_select %p35, 0, %s34
      %s37 = ssub.s32 %s24, %s36
      %s38 = ssub.s32 %s25, %s32
      %s39 = sor.u32 %s37, %s38
      %p40 = scmp.eq.s32.totalorder %s39, 0
      %s42 = sadd.s32 %s41, 1
      %s43 = scalar_select %p40, %s41, %s42
      %p46 = pneg %p40
      %p47 = scmp.eq.s32.totalorder %s17, 1
      %p48 = por %p46, %p47
      %p49 = scmp.ne.s32.totalorder %s41, %s44
      %p50 = scmp.eq.s32.totalorder %s17, 0
      %p51 = por %p49, %p50
      %p52 = scmp.ne.s32.totalorder %s41, %s44
      %p53 = scmp.eq.s32.totalorder %s22, 1
      %p54 = por %p52, %p53
      %p55 = scmp.ne.s32.totalorder %s44, %s45
      %p56 = scmp.eq.s32.totalorder %s22, 0
      %p57 = por %p55, %p56
      %p58 = scmp.ne.s32.totalorder %s44, %s45
      %p59 = scmp.eq.s32.totalorder %s23, 1
      %p60 = por %p58, %p59
      %p62 = scmp.ne.s32.totalorder %s45, %s61
      %p63 = scmp.eq.s32.totalorder %s23, 0
      %p64 = por %p62, %p63
      %s65 = ssub.s32 %s24, %s36
      %s66 = ssub.s32 %s25, %s32
      %s67 = sor.u32 %s65, %s66
      %p68 = scmp.eq.s32.totalorder %s67, 0
      %s70 = sadd.s32 %s69, 1
      %s71 = scalar_select %p68, %s69, %s70
      %p74 = pneg %p68
      %p75 = scmp.eq.s32.totalorder %s17, 1
      %p76 = por %p74, %p75
      %p77 = scmp.ne.s32.totalorder %s69, %s72
      %p78 = scmp.eq.s32.totalorder %s17, 0
      %p79 = por %p77, %p78
      %p80 = scmp.ne.s32.totalorder %s69, %s72
      %p81 = scmp.eq.s32.totalorder %s22, 1
      %p82 = por %p80, %p81
      %p83 = scmp.ne.s32.totalorder %s72, %s73
      %p84 = scmp.eq.s32.totalorder %s22, 0
      %p85 = por %p83, %p84
      %p86 = scmp.ne.s32.totalorder %s72, %s73
      %p87 = scmp.eq.s32.totalorder %s23, 1
      %p88 = por %p86, %p87
      %p90 = scmp.ne.s32.totalorder %s73, %s89
      %p91 = scmp.eq.s32.totalorder %s23, 0
      %p92 = por %p90, %p91
      %s93 = ssub.s32 %s24, %s36
      %p94 = scmp.eq.s32.totalorder %s93, 0
      %s96 = sadd.s32 %s95, 1
      %s97 = scalar_select %p94, %s95, %s96
      %p100 = pneg %p94
      %p101 = scmp.eq.s32.totalorder %s17, 1
      %p102 = por %p100, %p101
      %p103 = scmp.ne.s32.totalorder %s95, %s98
      %p104 = scmp.eq.s32.totalorder %s17, 0
      %p105 = por %p103, %p104
      %p106 = scmp.ne.s32.totalorder %s95, %s98
      %p107 = scmp.eq.s32.totalorder %s22, 1
      %p108 = por %p106, %p107
      %p109 = scmp.ne.s32.totalorder %s98, %s99
      %p110 = scmp.eq.s32.totalorder %s22, 0
      %p111 = por %p109, %p110
      %p112 = scmp.ne.s32.totalorder %s98, %s99
      %p113 = scmp.eq.s32.totalorder %s23, 1
      %p114 = por %p112, %p113
      %p116 = scmp.ne.s32.totalorder %s99, %s115
      %p117 = scmp.eq.s32.totalorder %s23, 0
      %p118 = por %p116, %p117
      %p119 = scmp.le.s32.totalorder 1, %s17
      %p120 = scmp.lt.s32.totalorder %s17, 3
      %p121 = pnand %p119, %p120
      %p122 = pneg %p121
      // Predicated region
      $region9: #{tpu_custom_call.1} parent=5 // pred_check
        _
      $region10: #{tpu_custom_call.1} parent=5 // pred_check_branch
        %124 = sbr.rel (%p121) target = $region12
      $region11: #{tpu_custom_call.1} parent=5 // pred_region
        %s125 = ssub.s32 %s17, 1
      $region12: #{tpu_custom_call.1} parent=5 // pred_fallthru
        _
      %p126 = scmp.lt.s32.totalorder %s17, 2
      // Predicated region
      $region13: #{tpu_custom_call.1} parent=5 // pred_check
        %p127 = pneg %p126
      $region14: #{tpu_custom_call.1} parent=5 // pred_check_branch
        %129 = sbr.rel (%p127) target = $region16
      $region15: #{tpu_custom_call.1} parent=5 // pred_region
        // Predicated region
        $region17: #{tpu_custom_call.1} parent=15 // pred_check
          %p130 = pneg %p51
        $region18: #{tpu_custom_call.1} parent=15 // pred_check_branch
          %132 = sbr.rel (%p130) target = $region20
        $region19: #{tpu_custom_call.1} parent=15 // pred_region
          %s133 = sand.u32 %s41, 1
          %s134 = scalar_lea.sflag [#allocation4], %s133
          %s135 = sand.u32 %s41, 1
          %s136 = smul.addr %s135, 32
          %s137 = scalar_lea.vmem [#allocation3], %s136
          %s138 = smul.u32 4, %s25
          %140 = vsyncadd %s134, 0
          %s141 = sadd.s32 %s138, 4
          %s142 = smul.addr %s24, 8
          %s143 = sadd.s32 %s141, %s142
          %s144 = smul.addr %s143, 8
          %s145 = scalar_lea.hbm %s0, %s144
          %s146 = sshll.u32 %s145, 4
          %s147 = int_to_ptr.hbm [resolvable:$true] %s146
          %s148 = sshll.u32 %s137, 4
          %s149 = int_to_ptr.vmem [resolvable:$true] %s148
          %154 = dma.hbm_to_vmem [thread:$0]  %s147, 512, %s149, %s134, 128, 128, 8
        $region20: #{tpu_custom_call.1} parent=15 // pred_fallthru
          _
        // Predicated region
        $region21: #{tpu_custom_call.1} parent=15 // pred_check
          %p155 = pneg %p79
        $region22: #{tpu_custom_call.1} parent=15 // pred_check_branch
          %157 = sbr.rel (%p155) target = $region24
        $region23: #{tpu_custom_call.1} parent=15 // pred_region
          %s158 = sand.u32 %s69, 1
          %s159 = scalar_lea.sflag [#allocation7], %s158
          %s160 = sand.u32 %s69, 1
          %s161 = smul.addr %s160, 8
          %s162 = scalar_lea.vmem [#allocation6], %s161
          %164 = vsyncadd %s159, 0
          %s165 = sadd.s32 %s25, %s24
          %s166 = smul.addr %s165, 8
          %s167 = scalar_lea.hbm %s1, %s166
          %s169 = sshll.u32 %s167, 4
          %s170 = int_to_ptr.hbm [resolvable:$true] %s169
          %s171 = sshll.u32 %s162, 4
          %s172 = int_to_ptr.vmem [resolvable:$true] %s171
          %174 = dma.hbm_to_vmem [thread:$0]  %s170, 128, %s172, %s159
        $region24: #{tpu_custom_call.1} parent=15 // pred_fallthru
          _
      $region16: #{tpu_custom_call.1} parent=5 // pred_fallthru
        _
      %p175 = scmp.le.s32.totalorder 1, %s17
      %p176 = scmp.lt.s32.totalorder %s17, 3
      %p177 = pnand %p175, %p176
      %p178 = pneg %p177
      // Predicated region
      $region25: #{tpu_custom_call.1} parent=5 // pred_check
        _
      $region26: #{tpu_custom_call.1} parent=5 // pred_check_branch
        %180 = sbr.rel (%p177) target = $region28
      $region27: #{tpu_custom_call.1} parent=5 // pred_region
        %s181 = ssub.s32 %s17, 1
        %s182 = sand.u32 %s44, 1
        %s183 = scalar_lea.sflag [#allocation4], %s182
        %s184 = sand.u32 %s44, 1
        %s185 = smul.addr %s184, 32
        %s186 = scalar_lea.vmem [#allocation3], %s185
        // Predicated region
        $region29: #{tpu_custom_call.1} parent=27 // pred_check
          %p187 = pneg %p57
        $region30: #{tpu_custom_call.1} parent=27 // pred_check_branch
          %189 = sbr.rel (%p187) target = $region32
        $region31: #{tpu_custom_call.1} parent=27 // pred_region
          %191 = dma.done %s183, 512
        $region32: #{tpu_custom_call.1} parent=27 // pred_fallthru
          _
        %s192 = sand.u32 %s72, 1
        %s193 = scalar_lea.sflag [#allocation7], %s192
        %s194 = sand.u32 %s72, 1
        %s195 = smul.addr %s194, 8
        %s196 = scalar_lea.vmem [#allocation6], %s195
        // Predicated region
        $region33: #{tpu_custom_call.1} parent=27 // pred_check
          %p197 = pneg %p85
        $region34: #{tpu_custom_call.1} parent=27 // pred_check_branch
          %199 = sbr.rel (%p197) target = $region36
        $region35: #{tpu_custom_call.1} parent=27 // pred_region
          %201 = dma.done %s193, 128
        $region36: #{tpu_custom_call.1} parent=27 // pred_fallthru
          _
        %s202 = sand.u32 %s44, 1
        %s203 = scalar_lea.sflag [#allocation4], %s202
        %s204 = sand.u32 %s44, 1
        %s205 = smul.addr %s204, 32
        %s206 = scalar_lea.vmem [#allocation3], %s205
        %p207 = pneg %p57
        %p208 = pneg %p54
        %s209 = sand.u32 %s72, 1
        %s210 = scalar_lea.sflag [#allocation7], %s209
        %s211 = sand.u32 %s72, 1
        %s212 = smul.addr %s211, 8
        %s213 = scalar_lea.vmem [#allocation6], %s212
        %p214 = pneg %p85
        %p215 = pneg %p82
        %p216 = pneg %p111
        %p217 = pneg %p108
        %s218 = sand.u32 %s98, 1
        %s219 = scalar_lea.sflag [#allocation5], %s218
        %s220 = sand.u32 %s98, 1
        %s221 = smul.addr %s220, 40
        %s222 = scalar_lea.vmem [#allocation8], %s221
        %s223 = smul.u32 4, %s27
        %p224 = scmp.eq.s32.totalorder %s27, 0
        // Predicated region
        $region37: #{tpu_custom_call.1} parent=27 // pred_check
          %p225 = pneg %p224
        $region38: #{tpu_custom_call.1} parent=27 // pred_check_branch
          %227 = sbr.rel (%p225) target = $region40
        $region39: #{tpu_custom_call.1} parent=27 // pred_region
          %228 = vst [vmem:[#allocation2] sm:$0xff] 0.0
          %229 = vst [vmem:[#allocation2 + $0x8] sm:$0xff] 0.0
          %230 = vst [vmem:[#allocation2 + $0x10] sm:$0xff] 0.0
          %231 = vst [vmem:[#allocation2 + $0x18] sm:$0xff] 0.0
          %232 = vst [vmem:[#allocation2 + $0x20] sm:$0xff] 0.0
        $region40: #{tpu_custom_call.1} parent=27 // pred_fallthru
          _
        %v233 = vld [vmem:[%s186] sm:$0xff]
        %v234 = vld [vmem:[%s186 + $0x8] sm:$0xff]
        %v235 = vld [vmem:[%s186 + $0x10] sm:$0xff]
        %v236 = vld [vmem:[%s186 + $0x18] sm:$0xff]
        %v237 = vld [vmem:[%s196] sm:$0xff]
        %v238 = vunpack.c.0.s8 %v237
        %v239 = vunpack.c.1.s8 %v237
        %v240 = vunpack.c.2.s8 %v237
        %v241 = vunpack.c.3.s8 %v237
        %v242 = vcvt.s32.f32 %v238
        %v243 = vcvt.s32.f32 %v239
        %v244 = vcvt.s32.f32 %v240
        %v245 = vcvt.s32.f32 %v241
        %v246 = vand.u32 2147483647, %v233
        %v247 = vand.u32 2147483647, %v234
        %v248 = vand.u32 2147483647, %v235
        %v249 = vand.u32 2147483647, %v236
        %v250 = vsub.f32 0.0, %v246
        %v251 = vsub.f32 0.0, %v247
        %v252 = vsub.f32 0.0, %v248
        %v253 = vsub.f32 0.0, %v249
        %v254 = vmul.f32 %v250, 1.442695
        %v255 = vpow.pop %v254
        %v256 = vmul.f32 %v251, 1.442695
        %v257 = vpow.pop %v256
        %v258 = vmul.f32 %v252, 1.442695
        %v259 = vpow.pop %v258
        %v260 = vmul.f32 %v253, 1.442695
        %v261 = vpow.pop %v260
        %v262 = vadd.f32 %v255, 1.0
        %v263 = vadd.f32 %v257, 1.0
        %v264 = vadd.f32 %v259, 1.0
        %v265 = vadd.f32 %v261, 1.0
        %v266 = vrcp.pop %v262
        %v267 = vmul.f32 %v262, %v266
        %v268 = vsub.f32 1.0, %v267
        %v269 = vmul.f32 %v266, %v268
        %v270 = vadd.f32 %v266, %v269
        %vm271 = vweird.f32 %v262
        %vm272 = vweird.f32 %v266
        %vm273 = vmor %vm271, %vm272
        %v274 = vsel %vm273, %v266, %v270
        %v275 = vand.u32 2147483647, %v262
        %vm276 = vcmp.eq.f32.partialorder %v275, 8.507059e+37
        %v277 = vand.u32 %v262, 2147483648
        %v278 = vor.u32 1.1754944e-38, %v277
        %v279 = vsel %vm276, %v278, %v274
        %v280 = vmul.f32 1.0, %v279
        %v281 = vrcp.pop %v263
        %v282 = vmul.f32 %v263, %v281
        %v283 = vsub.f32 1.0, %v282
        %v284 = vmul.f32 %v281, %v283
        %v285 = vadd.f32 %v281, %v284
        %vm286 = vweird.f32 %v263
        %vm287 = vweird.f32 %v281
        %vm288 = vmor %vm286, %vm287
        %v289 = vsel %vm288, %v281, %v285
        %v290 = vand.u32 2147483647, %v263
        %vm291 = vcmp.eq.f32.partialorder %v290, 8.507059e+37
        %v292 = vand.u32 %v263, 2147483648
        %v293 = vor.u32 1.1754944e-38, %v292
        %v294 = vsel %vm291, %v293, %v289
        %v295 = vmul.f32 1.0, %v294
        %v296 = vrcp.pop %v264
        %v297 = vmul.f32 %v264, %v296
        %v298 = vsub.f32 1.0, %v297
        %v299 = vmul.f32 %v296, %v298
        %v300 = vadd.f32 %v296, %v299
        %vm301 = vweird.f32 %v264
        %vm302 = vweird.f32 %v296
        %vm303 = vmor %vm301, %vm302
        %v304 = vsel %vm303, %v296, %v300
        %v305 = vand.u32 2147483647, %v264
        %vm306 = vcmp.eq.f32.partialorder %v305, 8.507059e+37
        %v307 = vand.u32 %v264, 2147483648
        %v308 = vor.u32 1.1754944e-38, %v307
        %v309 = vsel %vm306, %v308, %v304
        %v310 = vmul.f32 1.0, %v309
        %v311 = vrcp.pop %v265
        %v312 = vmul.f32 %v265, %v311
        %v313 = vsub.f32 1.0, %v312
        %v314 = vmul.f32 %v311, %v313
        %v315 = vadd.f32 %v311, %v314
        %vm316 = vweird.f32 %v265
        %vm317 = vweird.f32 %v311
        %vm318 = vmor %vm316, %vm317
        %v319 = vsel %vm318, %v311, %v315
        %v320 = vand.u32 2147483647, %v265
        %vm321 = vcmp.eq.f32.partialorder %v320, 8.507059e+37
        %v322 = vand.u32 %v265, 2147483648
        %v323 = vor.u32 1.1754944e-38, %v322
        %v324 = vsel %vm321, %v323, %v319
        %v325 = vmul.f32 1.0, %v324
        %vm326 = vcmp.ge.f32.partialorder %v233, 0.0
        %vm327 = vcmp.ge.f32.partialorder %v234, 0.0
        %vm328 = vcmp.ge.f32.partialorder %v235, 0.0
        %vm329 = vcmp.ge.f32.partialorder %v236, 0.0
        %v330 = vsub.f32 1.0, %v280
        %v331 = vsub.f32 1.0, %v295
        %v332 = vsub.f32 1.0, %v310
        %v333 = vsub.f32 1.0, %v325
        %v334 = vsel %vm326, %v280, %v330
        %v335 = vsel %vm327, %v295, %v331
        %v336 = vsel %vm328, %v310, %v332
        %v337 = vsel %vm329, %v325, %v333
        %v338 = vmax.f32 %v233, 0.0
        %v339 = vmax.f32 %v234, 0.0
        %v340 = vmax.f32 %v235, 0.0
        %v341 = vmax.f32 %v236, 0.0
        %v342 = vmul.f32 %v233, %v242
        %v343 = vmul.f32 %v234, %v243
        %v344 = vmul.f32 %v235, %v244
        %v345 = vmul.f32 %v236, %v245
        %v346 = vsub.f32 %v338, %v342
        %v347 = vsub.f32 %v339, %v343
        %v348 = vsub.f32 %v340, %v344
        %v349 = vsub.f32 %v341, %v345
        %v350 = vadd.f32 %v255, 1.0
        %v351 = vlog2.pop %v350
        %v352 = vmul.f32 %v351, 0.6931472
        %v353 = vmul.f32 -0.5, %v255
        %v354 = vadd.f32 %v353, 1.0
        %v355 = vmul.f32 %v354, %v255
        %v356 = vand.u32 2147483647, %v255
        %vm357 = vcmp.lt.f32.partialorder %v356, 0.0004427343
        %v358 = vsel %vm357, %v355, %v352
        %v359 = vadd.f32 %v257, 1.0
        %v360 = vlog2.pop %v359
        %v361 = vmul.f32 %v360, 0.6931472
        %v362 = vmul.f32 -0.5, %v257
        %v363 = vadd.f32 %v362, 1.0
        %v364 = vmul.f32 %v363, %v257
        %v365 = vand.u32 2147483647, %v257
        %vm366 = vcmp.lt.f32.partialorder %v365, 0.0004427343
        %v367 = vsel %vm366, %v364, %v361
        %v368 = vadd.f32 %v259, 1.0
        %v369 = vlog2.pop %v368
        %v370 = vmul.f32 %v369, 0.6931472
        %v371 = vmul.f32 -0.5, %v259
        %v372 = vadd.f32 %v371, 1.0
        %v373 = vmul.f32 %v372, %v259
        %v374 = vand.u32 2147483647, %v259
        %vm375 = vcmp.lt.f32.partialorder %v374, 0.0004427343
        %v376 = vsel %vm375, %v373, %v370
        %v377 = vadd.f32 %v261, 1.0
        %v378 = vlog2.pop %v377
        %v379 = vmul.f32 %v378, 0.6931472
        %v380 = vmul.f32 -0.5, %v261
        %v381 = vadd.f32 %v380, 1.0
        %v382 = vmul.f32 %v381, %v261
        %v383 = vand.u32 2147483647, %v261
        %vm384 = vcmp.lt.f32.partialorder %v383, 0.0004427343
        %v385 = vsel %vm384, %v382, %v379
        %v386 = vadd.f32 %v346, %v358
        %v387 = vadd.f32 %v347, %v367
        %v388 = vadd.f32 %v348, %v376
        %v389 = vadd.f32 %v349, %v385
        %vm390 = vcmp.gt.f32.partialorder %v242, 0.5
        %vm391 = vcmp.gt.f32.partialorder %v243, 0.5
        %vm392 = vcmp.gt.f32.partialorder %v244, 0.5
        %vm393 = vcmp.gt.f32.partialorder %v245, 0.5
        %v394 = vsub.f32 1.0, %v334
        %v395 = vsub.f32 1.0, %v335
        %v396 = vsub.f32 1.0, %v336
        %v397 = vsub.f32 1.0, %v337
        %v398 = vsel %vm390, %v334, %v394
        %v399 = vsel %vm391, %v335, %v395
        %v400 = vsel %vm392, %v336, %v396
        %v401 = vsel %vm393, %v337, %v397
        %v402 = vsub.f32 1.0, %v398
        %v403 = vsub.f32 1.0, %v399
        %v404 = vsub.f32 1.0, %v400
        %v405 = vsub.f32 1.0, %v401
        %v406 = vmul.f32 %v402, %v402
        %v407 = vmul.f32 %v403, %v403
        %v408 = vmul.f32 %v404, %v404
        %v409 = vmul.f32 %v405, %v405
        %v410 = vmul.f32 %v406, %v402
        %v411 = vmul.f32 %v407, %v403
        %v412 = vmul.f32 %v408, %v404
        %v413 = vmul.f32 %v409, %v405
        %v414 = vmul.f32 %v410, 0.35
        %v415 = vmul.f32 %v411, 0.35
        %v416 = vmul.f32 %v412, 0.35
        %v417 = vmul.f32 %v413, 0.35
        %v418 = vmul.f32 %v414, %v386
        %v419 = vmul.f32 %v415, %v387
        %v420 = vmul.f32 %v416, %v388
        %v421 = vmul.f32 %v417, %v389
        %v422 = vmul.f32 %v334, %v242
        %v423 = vmul.f32 %v335, %v243
        %v424 = vmul.f32 %v336, %v244
        %v425 = vmul.f32 %v337, %v245
        %v426 = vadd.f32 %v422, %v423
        %v427 = vadd.f32 %v426, %v424
        %v428 = vadd.f32 %v427, %v425
        %v429 = vld [vmem:[#allocation2] sm:$0xff]
        %v430 = vadd.f32 %v429, %v428
        %431 = vst [vmem:[#allocation2] sm:$0xff] %v430
        %v432 = vadd.f32 %v334, %v335
        %v433 = vadd.f32 %v432, %v336
        %v434 = vadd.f32 %v433, %v337
        %v435 = vld [vmem:[#allocation2 + $0x8] sm:$0xff]
        %v436 = vadd.f32 %v435, %v434
        %437 = vst [vmem:[#allocation2 + $0x8] sm:$0xff] %v436
        %v438 = vadd.f32 %v242, %v243
        %v439 = vadd.f32 %v438, %v244
        %v440 = vadd.f32 %v439, %v245
        %v441 = vld [vmem:[#allocation2 + $0x10] sm:$0xff]
        %v442 = vadd.f32 %v441, %v440
        %443 = vst [vmem:[#allocation2 + $0x10] sm:$0xff] %v442
        %v444 = vadd.f32 %v386, %v387
        %v445 = vadd.f32 %v444, %v388
        %v446 = vadd.f32 %v445, %v389
        %v447 = vld [vmem:[#allocation2 + $0x18] sm:$0xff]
        %v448 = vadd.f32 %v447, %v446
        %449 = vst [vmem:[#allocation2 + $0x18] sm:$0xff] %v448
        %v450 = vadd.f32 %v418, %v419
        %v451 = vadd.f32 %v450, %v420
        %v452 = vadd.f32 %v451, %v421
        %v453 = vld [vmem:[#allocation2 + $0x20] sm:$0xff]
        %v454 = vadd.f32 %v453, %v452
        %455 = vst [vmem:[#allocation2 + $0x20] sm:$0xff] %v454
        // Predicated region
        $region41: #{tpu_custom_call.1} parent=27 // pred_check
          %p456 = pneg %p224
        $region42: #{tpu_custom_call.1} parent=27 // pred_check_branch
          %458 = sbr.rel (%p456) target = $region44
        $region43: #{tpu_custom_call.1} parent=27 // pred_region
          %v459 = vld [vmem:[#allocation2] sm:$0xff]
          %v460 = vld [vmem:[#allocation2 + $0x8] sm:$0xff]
          %v461 = vld [vmem:[#allocation2 + $0x10] sm:$0xff]
          %v462 = vld [vmem:[#allocation2 + $0x18] sm:$0xff]
          %v463 = vld [vmem:[#allocation2 + $0x20] sm:$0xff]
          %464 = vst [vmem:[%s222] sm:$0xff] %v459
          %465 = vst [vmem:[%s222 + $0x8] sm:$0xff] %v460
          %466 = vst [vmem:[%s222 + $0x10] sm:$0xff] %v461
          %467 = vst [vmem:[%s222 + $0x18] sm:$0xff] %v462
          %468 = vst [vmem:[%s222 + $0x20] sm:$0xff] %v463
        $region44: #{tpu_custom_call.1} parent=27 // pred_fallthru
          _
        %s469 = sand.u32 %s98, 1
        %s470 = scalar_lea.sflag [#allocation5], %s469
        %s471 = sand.u32 %s98, 1
        %s472 = smul.addr %s471, 40
        %s473 = scalar_lea.vmem [#allocation8], %s472
        // Predicated region
        $region45: #{tpu_custom_call.1} parent=27 // pred_check
          %p474 = pneg %p108
        $region46: #{tpu_custom_call.1} parent=27 // pred_check_branch
          %476 = sbr.rel (%p474) target = $region48
        $region47: #{tpu_custom_call.1} parent=27 // pred_region
          %478 = vsyncadd %s470, 0
          %s479 = smul.addr %s26, 5
          %s480 = smul.addr %s479, 8
          %s481 = scalar_lea.hbm %s2, %s480
          %s482 = sshll.u32 %s473, 4
          %s483 = int_to_ptr.vmem [resolvable:$true] %s482
          %s484 = sshll.u32 %s481, 4
          %s485 = int_to_ptr.hbm [resolvable:$true] %s484
          %490 = dma.vmem_to_hbm [thread:$0]  %s483, 640, %s485, %s470, 128, 128, 8
        $region48: #{tpu_custom_call.1} parent=27 // pred_fallthru
          _
      $region28: #{tpu_custom_call.1} parent=5 // pred_fallthru
        _
      %p491 = scmp.le.s32.totalorder 2, %s17
      // Predicated region
      $region49: #{tpu_custom_call.1} parent=5 // pred_check
        %p492 = pneg %p491
      $region50: #{tpu_custom_call.1} parent=5 // pred_check_branch
        %494 = sbr.rel (%p492) target = $region52
      $region51: #{tpu_custom_call.1} parent=5 // pred_region
        %s495 = ssub.s32 %s17, 2
        // Predicated region
        $region53: #{tpu_custom_call.1} parent=51 // pred_check
          %p496 = pneg %p114
        $region54: #{tpu_custom_call.1} parent=51 // pred_check_branch
          %498 = sbr.rel (%p496) target = $region56
        $region55: #{tpu_custom_call.1} parent=51 // pred_region
          %s499 = sand.u32 %s99, 1
          %s500 = scalar_lea.sflag [#allocation5], %s499
          %s501 = sand.u32 %s99, 1
          %s502 = smul.addr %s501, 40
          %s503 = scalar_lea.vmem [#allocation8], %s502
          %505 = dma.done %s500, 640
        $region56: #{tpu_custom_call.1} parent=51 // pred_fallthru
          _
      $region52: #{tpu_custom_call.1} parent=5 // pred_fallthru
        _
    $region6: #{tpu_custom_call.1} parent=1 // loop_footer
      %s21 = sadd.s32 1, %s17
    $region7: #{tpu_custom_call.1} parent=1 // loop_footer_branch
      %16 = sbr.rel target = $region3
    $region8: #{tpu_custom_call.1} parent=1 // loop_exit
      _
    %506 = vsyncpa [#allocation4], 1
    %s507 = scalar_lea.sflag [#allocation4], 1
    %508 = vsyncpa %s507, 1
    %509 = vsyncpa [#allocation7], 1
    %s510 = scalar_lea.sflag [#allocation7], 1
    %511 = vsyncpa %s510, 1
    %512 = vsyncpa [#allocation5], 1
    %s513 = scalar_lea.sflag [#allocation5], 1
    %514 = vsyncpa %s513, 1

</llo_original>
